<compile_context>
chip_gen: v7x
topology: tpu7x:2x2x1
jax: 0.10.0
libtpu: 0.0.40
codegen_flags: <defaults>
</compile_context>

<pallas_src>
import jax
import jax.numpy as jnp
from jax.experimental import pallas as pl
from jax.experimental.pallas import tpu as pltpu


_LANE = 128
# ~4 MiB per tile: 2 pipelined input + 2 pipelined output buffers = 16 MiB.
# We raise the scoped-VMEM limit explicitly (see vmem_limit_bytes below) so this
# is safe on v5e (16 MiB default scoped limit) as well as v6e/v7x.
_TARGET_TILE_BYTES = 4 * 1024 * 1024
# Below this, a standalone Pallas pass can't beat XLA (which can fuse the clamp
# into its producer and skips the ~us custom-call launch overhead).
_MIN_PALLAS_BYTES = 1 * 1024 * 1024
_VMEM_LIMIT_BYTES = 32 * 1024 * 1024


def _hardtanh01_kernel(x_ref, o_ref):
    # Hardtanh(min_val=0, max_val=1) == clamp(x, 0, 1). Weak-typed 0.0/1.0
    # preserve bf16/f32 input dtype; NaNs propagate like PyTorch's Hardtanh.
    x = x_ref[...]
    o_ref[...] = jnp.minimum(jnp.maximum(x, 0.0), 1.0).astype(o_ref.dtype)


def _sublane_multiple(itemsize):
    # Sub-32-bit dtypes pack along sublanes; keep tile rows aligned to the pack.
    if itemsize >= 4:
        return 8
    if itemsize == 2:
        return 16
    return 32


def bounded_output_layer(x):
    """Elementwise clamp to [0, 1], matching nn.Hardtanh(min_val=0, max_val=1)."""
    orig_shape = x.shape
    dtype = x.dtype
    n = x.size
    itemsize = jnp.dtype(dtype).itemsize

    # --- Pick a lane-dense slab width (wide multiple of 128). ---------------
    width = None
    for w in (4096, 2048, 1024, 512, 256, 128):
        if n % w == 0:
            width = w
            break

    # --- XLA fast path -------------------------------------------------------
    # * non-lane-aligned sizes: no pad+slice (that tripled HBM traffic);
    # * tiny tensors: custom-call launch overhead dominates, and XLA can fuse
    #   the clamp into the producing op (removing a full HBM read+write);
    # * non-float dtypes: keep the math exact (Hardtanh is meant for floats).
    if (
        width is None
        or n * itemsize < _MIN_PALLAS_BYTES
        or not jnp.issubdtype(dtype, jnp.floating)
    ):
        return jnp.clip(x, 0, 1).astype(dtype)

    rows = n // width
    x2d = x.reshape(rows, width)

    # --- Row tiling: ~4 MiB tiles, rows-per-tile a multiple of the sublane pack.
    sub = _sublane_multiple(itemsize)
    tile_rows = _TARGET_TILE_BYTES // (width * itemsize)
    tile_rows = max(sub, (tile_rows // sub) * sub)
    if tile_rows >= rows:
        if rows >= 2 * sub:
            # Whole array fits in one tile: split into (at least) two row-tiles
            # so dimension_semantics=("parallel",) has >= 2 grid steps to shard
            # across the two TensorCores on v7x.
            tile_rows = max(sub, (rows // 2 // sub) * sub)
        else:
            # Block equal to the full array dim is always legal (even if
            # rows % 8 != 0); run as a single tile.
            tile_rows = rows
    grid = (pl.cdiv(rows, tile_rows),)

    cost = pl.CostEstimate(
        flops=2 * n,                       # one max + one min per element
        transcendentals=0,
        bytes_accessed=2 * n * itemsize,   # one read + one write of the tensor
    )

    out2d = pl.pallas_call(
        _hardtanh01_kernel,
        out_shape=jax.ShapeDtypeStruct(x2d.shape, dtype),
        grid=grid,
        in_specs=[pl.BlockSpec((tile_rows, width), lambda i: (i, 0))],
        out_specs=pl.BlockSpec((tile_rows, width), lambda i: (i, 0)),
        # Elementwise with identical in/out block maps -> clamp in place; saves
        # the extra n-byte output allocation (peak HBM pressure), esp. on v5e.
        input_output_aliases={0: 0},
        compiler_params=pltpu.CompilerParams(
            # "parallel": megacore-shard the streaming loop on v7x; neutral on v5e/v6e.
            dimension_semantics=("parallel",),
            # 4 MiB tiles * (2 in + 2 out) pipelined buffers = 16 MiB, which would
            # exactly hit v5e's 16 MiB default scoped-VMEM limit; raise it.
            vmem_limit_bytes=_VMEM_LIMIT_BYTES,
        ),
        cost_estimate=cost,
    )(x2d)

    return out2d.reshape(orig_shape)


if __name__ == "__main__":
    key = jax.random.PRNGKey(0)
    k0, k1, k2 = jax.random.split(key, 3)

    # Small NCHW input consistent with a conv-stack output: (B=2, C=4, H=16, W=16).
    # Small -> routed to the fusable XLA clamp fast path.
    x_small = jax.random.normal(k0, (2, 4, 16, 16), dtype=jnp.float32) * 2.0
    y_small = jax.block_until_ready(bounded_output_layer(x_small))
    assert y_small.shape == x_small.shape and y_small.dtype == x_small.dtype
    assert jnp.allclose(y_small, jnp.clip(x_small, 0.0, 1.0)), "mismatch (small path)"

    # Medium lane-aligned input (2 MiB) that exercises the Pallas tiled path
    # (splits into 2 row-tiles -> both v7x TensorCores get work).
    x_med = jax.random.normal(k1, (8, 4, 128, 128), dtype=jnp.float32) * 2.0
    y_med = jax.block_until_ready(bounded_output_layer(x_med))
    assert y_med.shape == x_med.shape and y_med.dtype == x_med.dtype
    assert jnp.allclose(y_med, jnp.clip(x_med, 0.0, 1.0)), "mismatch (pallas path)"

    # Non-lane-aligned size -> XLA fallback (no pad+slice extra HBM passes).
    x_odd = jax.random.normal(k2, (3, 5, 7), dtype=jnp.float32) * 2.0
    y_odd = jax.block_until_ready(bounded_output_layer(x_odd))
    assert y_odd.shape == x_odd.shape and y_odd.dtype == x_odd.dtype
    assert jnp.allclose(y_odd, jnp.clip(x_odd, 0.0, 1.0)), "mismatch (ragged path)"

    print("KERNEL_OK")
</pallas_src>

<mosaic_0001>
module attributes {stable_mosaic.version = 11 : i64} {
  func.func @_hardtanh01_kernel(%arg0: i32, %arg1: memref<64x4096xf32, #tpu.memory_space<vmem>>, %arg2: memref<64x4096xf32, #tpu.memory_space<vmem>>) attributes {dimension_semantics = [#tpu.dimension_semantics<parallel>], iteration_bounds = array<i64: 2>, scalar_prefetch = 0 : i64, scratch_operands = 0 : i64, tpu.core_type = #tpu.core_type<tc>, window_params = [{transform_indices = @transform_0, window_bounds = array<i64: 64, 4096>}, {transform_indices = @transform_1, window_bounds = array<i64: 64, 4096>}]} {
    %c0 = arith.constant 0 : index
    %c0_0 = arith.constant 0 : index
    %0 = vector.load %arg1[%c0, %c0_0] : memref<64x4096xf32, #tpu.memory_space<vmem>>, vector<64x4096xf32>
    %cst = arith.constant 0.000000e+00 : f32
    %1 = vector.broadcast %cst : f32 to vector<64x4096xf32>
    %2 = arith.maximumf %0, %1 : vector<64x4096xf32>
    %cst_1 = arith.constant 1.000000e+00 : f32
    %3 = vector.broadcast %cst_1 : f32 to vector<64x4096xf32>
    %4 = arith.minimumf %2, %3 : vector<64x4096xf32>
    %c0_2 = arith.constant 0 : index
    %c0_3 = arith.constant 0 : index
    %5 = vector.load %arg2[%c0_2, %c0_3] : memref<64x4096xf32, #tpu.memory_space<vmem>>, vector<64x4096xf32>
    tpu.vector_store %arg2[%c0_2, %c0_3], %4 {strides = array<i32>} : memref<64x4096xf32, #tpu.memory_space<vmem>>, vector<64x4096xf32>,
    return
  }
  func.func @transform_0(%arg0: i32) -> (i32, i32) {
    %c0_i32 = arith.constant 0 : i32
    %c0_i32_0 = arith.constant 0 : i32
    return %arg0, %c0_i32 : i32, i32
  }
  func.func @transform_1(%arg0: i32) -> (i32, i32) {
    %c0_i32 = arith.constant 0 : i32
    %c0_i32_0 = arith.constant 0 : i32
    return %arg0, %c0_i32 : i32, i32
  }
}

</mosaic_0001>

<llo_original>
// kernel: tpu_custom_call.1
$region0: #{tpu_custom_call.1}
  #allocation0 [shape = 'u32[]', space=smem, size = 0x4, offset = 0x4, fixed_abs, tag = 'smem constant byte address 0x4 - core index']
  #allocation1 [shape = 'u32[144,128]{1,0:T(1,128)}', space=vmem, size = 0x12000, scoped, tag = 'internal scratch']
  %s0 = inlined_call_operand.hbm [shape: f32[128,4096], index: 0, kind: input, shape index: {}, may-alias: {0,1}]
  %s1 = inlined_call_operand.hbm [shape: f32[128,4096], index: 1, kind: output, shape index: {}, may-alias: {0,1}]
  %s2 = sld [smem:[#allocation0]]
  $region41: #{tpu_custom_call.1} parent=0
    _
  %s4 = ssub.s32 1, %s2
  %s5 = scalar_select 0, %s4, %s2
  $region1: #{tpu_custom_call.1} parent=0
    #allocation2 [shape = 'u8[2097152]{0}', space=vmem, size = 0x200000, scoped, tag = 'input window, operand 0']
    #allocation3 [shape = 's32[2]{0}', space=sflag, size = 0x8, scoped, tag = 'scoped memory for tpu_custom_call.1']
    #allocation4 [shape = 's32[2]{0}', space=sflag, size = 0x8, scoped, tag = 'scoped memory for tpu_custom_call.1']
    #allocation5 [shape = 'u8[2097152]{0}', space=vmem, size = 0x200000, scoped, tag = 'output window, operand 0']
    %6 = vsyncpa [#allocation3], 0
    %s7 = scalar_lea.sflag [#allocation3], 1
    %8 = vsyncpa %s7, 0
    %9 = vsyncpa [#allocation4], 0
    %s10 = scalar_lea.sflag [#allocation4], 1
    %11 = vsyncpa %s10, 0
    loop: start=0, step=1, limit=4
    $region2: #{tpu_custom_call.1} parent=1 // loop_pre_header
      _
    $region3: #{tpu_custom_call.1} parent=1 // loop_header
      %s13 = sphi 0, %s17
      %p14 = scmp.ge.s32.totalorder %s13, 4
      %s23 = sphi 0, %s25
      %s26 = sphi 0, %s23
      %s27 = sphi 0, %s26
      %s43 = sphi 0, %s27
      %s49 = sphi 0, %s51
      %s52 = sphi 0, %s49
      %s53 = sphi 0, %s52
      %s69 = sphi 0, %s53
    $region4: #{tpu_custom_call.1} parent=1 // loop_header_branch
      %16 = sbr.rel (%p14) target = $region8
    $region5: #{tpu_custom_call.1} parent=1 // loop_body
      %s18 = ssub.s32 %s13, 1
      %s19 = ssub.s32 %s13, 2
      %s20 = sadd.s32 %s13, 1
      %s21 = ssub.s32 %s13, %s20
      %p22 = scmp.eq.s32.totalorder %s21, 0
      %s24 = sadd.s32 %s23, 1
      %s25 = scalar_select %p22, %s23, %s24
      %p28 = pneg %p22
      %p29 = scmp.eq.s32.totalorder %s13, 1
      %p30 = por %p28, %p29
      %p31 = scmp.ne.s32.totalorder %s23, %s26
      %p32 = scmp.eq.s32.totalorder %s13, 0
      %p33 = por %p31, %p32
      %p34 = scmp.ne.s32.totalorder %s23, %s26
      %p35 = scmp.eq.s32.totalorder %s18, 1
      %p36 = por %p34, %p35
      %p37 = scmp.ne.s32.totalorder %s26, %s27
      %p38 = scmp.eq.s32.totalorder %s18, 0
      %p39 = por %p37, %p38
      %p40 = scmp.ne.s32.totalorder %s26, %s27
      %p41 = scmp.eq.s32.totalorder %s19, 1
      %p42 = por %p40, %p41
      %p44 = scmp.ne.s32.totalorder %s27, %s43
      %p45 = scmp.eq.s32.totalorder %s19, 0
      %p46 = por %p44, %p45
      %s47 = ssub.s32 %s13, %s20
      %p48 = scmp.eq.s32.totalorder %s47, 0
      %s50 = sadd.s32 %s49, 1
      %s51 = scalar_select %p48, %s49, %s50
      %p54 = pneg %p48
      %p55 = scmp.eq.s32.totalorder %s13, 1
      %p56 = por %p54, %p55
      %p57 = scmp.ne.s32.totalorder %s49, %s52
      %p58 = scmp.eq.s32.totalorder %s13, 0
      %p59 = por %p57, %p58
      %p60 = scmp.ne.s32.totalorder %s49, %s52
      %p61 = scmp.eq.s32.totalorder %s18, 1
      %p62 = por %p60, %p61
      %p63 = scmp.ne.s32.totalorder %s52, %s53
      %p64 = scmp.eq.s32.totalorder %s18, 0
      %p65 = por %p63, %p64
      %p66 = scmp.ne.s32.totalorder %s52, %s53
      %p67 = scmp.eq.s32.totalorder %s19, 1
      %p68 = por %p66, %p67
      %p70 = scmp.ne.s32.totalorder %s53, %s69
      %p71 = scmp.eq.s32.totalorder %s19, 0
      %p72 = por %p70, %p71
      %p73 = scmp.le.s32.totalorder 1, %s13
      %p74 = scmp.lt.s32.totalorder %s13, 3
      %p75 = pnand %p73, %p74
      %p76 = pneg %p75
      // Predicated region
      $region9: #{tpu_custom_call.1} parent=5 // pred_check
        _
      $region10: #{tpu_custom_call.1} parent=5 // pred_check_branch
        %78 = sbr.rel (%p75) target = $region12
      $region11: #{tpu_custom_call.1} parent=5 // pred_region
        %s79 = ssub.s32 %s13, 1
      $region12: #{tpu_custom_call.1} parent=5 // pred_fallthru
        _
      %p80 = scmp.lt.s32.totalorder %s13, 2
      // Predicated region
      $region13: #{tpu_custom_call.1} parent=5 // pred_check
        %p81 = pneg %p80
      $region14: #{tpu_custom_call.1} parent=5 // pred_check_branch
        %83 = sbr.rel (%p81) target = $region16
      $region15: #{tpu_custom_call.1} parent=5 // pred_region
        // Predicated region
        $region17: #{tpu_custom_call.1} parent=15 // pred_check
          %p84 = pneg %p33
        $region18: #{tpu_custom_call.1} parent=15 // pred_check_branch
          %86 = sbr.rel (%p84) target = $region20
        $region19: #{tpu_custom_call.1} parent=15 // pred_region
          %s87 = sand.u32 %s23, 1
          %s88 = scalar_lea.sflag [#allocation3], %s87
          %s89 = sand.u32 %s23, 1
          %s90 = smul.addr %s89, 2048
          %s91 = scalar_lea.vmem [#allocation2], %s90
          %s92 = smul.u32 8, %s13
          %s94 = ssub.s32 32768, 32768
          %95 = vsyncadd %s88, %s94
          %s96 = smul.addr %s92, 32
          %s97 = smul.addr %s96, 128
          %s98 = scalar_lea.hbm %s0, %s97
          %s99 = sshll.u32 %s91, 4
          %s100 = int_to_ptr.vmem [resolvable:$true] %s99
          %105 = dma.hbm_to_vmem [thread:$0]  %s98, 32768, %s100, %s88, 4096, 4096, 256
        $region20: #{tpu_custom_call.1} parent=15 // pred_fallthru
          _
      $region16: #{tpu_custom_call.1} parent=5 // pred_fallthru
        _
      %p106 = scmp.le.s32.totalorder 1, %s13
      %p107 = scmp.lt.s32.totalorder %s13, 3
      %p108 = pnand %p106, %p107
      %p109 = pneg %p108
      // Predicated region
      $region21: #{tpu_custom_call.1} parent=5 // pred_check
        _
      $region22: #{tpu_custom_call.1} parent=5 // pred_check_branch
        %111 = sbr.rel (%p108) target = $region24
      $region23: #{tpu_custom_call.1} parent=5 // pred_region
        %s112 = ssub.s32 %s13, 1
        %s113 = sand.u32 %s26, 1
        %s114 = scalar_lea.sflag [#allocation3], %s113
        %s115 = sand.u32 %s26, 1
        %s116 = smul.addr %s115, 2048
        %s117 = scalar_lea.vmem [#allocation2], %s116
        // Predicated region
        $region25: #{tpu_custom_call.1} parent=23 // pred_check
          %p118 = pneg %p39
        $region26: #{tpu_custom_call.1} parent=23 // pred_check_branch
          %120 = sbr.rel (%p118) target = $region28
        $region27: #{tpu_custom_call.1} parent=23 // pred_region
          %121 = dma.done %s114, 32768
        $region28: #{tpu_custom_call.1} parent=23 // pred_fallthru
          _
        %s122 = sand.u32 %s26, 1
        %s123 = scalar_lea.sflag [#allocation3], %s122
        %s124 = sand.u32 %s26, 1
        %s125 = smul.addr %s124, 2048
        %s126 = scalar_lea.vmem [#allocation2], %s125
        %p127 = pneg %p39
        %p128 = pneg %p36
        %p129 = pneg %p65
        %p130 = pneg %p62
        %s131 = sand.u32 %s52, 1
        %s132 = scalar_lea.sflag [#allocation4], %s131
        %s133 = sand.u32 %s52, 1
        %s134 = smul.addr %s133, 2048
        %s135 = scalar_lea.vmem [#allocation5], %s134
        %s136 = smul.u32 8, %s18
        %s137 = smul.u32 8, %s18
        %v138 = vld [vmem:[%s117] sm:$0xff]
        %v139 = vld [vmem:[%s117 + $0x8] sm:$0xff]
        %v140 = vld [vmem:[%s117 + $0x10] sm:$0xff]
        %v141 = vld [vmem:[%s117 + $0x18] sm:$0xff]
        %v142 = vld [vmem:[%s117 + $0x20] sm:$0xff]
        %v143 = vld [vmem:[%s117 + $0x28] sm:$0xff]
        %v144 = vld [vmem:[%s117 + $0x30] sm:$0xff]
        %v145 = vld [vmem:[%s117 + $0x38] sm:$0xff]
        %v146 = vld [vmem:[%s117 + $0x40] sm:$0xff]
        %v147 = vld [vmem:[%s117 + $0x48] sm:$0xff]
        %v148 = vld [vmem:[%s117 + $0x50] sm:$0xff]
        %v149 = vld [vmem:[%s117 + $0x58] sm:$0xff]
        %v150 = vld [vmem:[%s117 + $0x60] sm:$0xff]
        %v151 = vld [vmem:[%s117 + $0x68] sm:$0xff]
        %v152 = vld [vmem:[%s117 + $0x70] sm:$0xff]
        %v153 = vld [vmem:[%s117 + $0x78] sm:$0xff]
        %v154 = vld [vmem:[%s117 + $0x80] sm:$0xff]
        %v155 = vld [vmem:[%s117 + $0x88] sm:$0xff]
        %v156 = vld [vmem:[%s117 + $0x90] sm:$0xff]
        %v157 = vld [vmem:[%s117 + $0x98] sm:$0xff]
        %v158 = vld [vmem:[%s117 + $0xa0] sm:$0xff]
        %v159 = vld [vmem:[%s117 + $0xa8] sm:$0xff]
        %v160 = vld [vmem:[%s117 + $0xb0] sm:$0xff]
        %v161 = vld [vmem:[%s117 + $0xb8] sm:$0xff]
        %v162 = vld [vmem:[%s117 + $0xc0] sm:$0xff]
        %v163 = vld [vmem:[%s117 + $0xc8] sm:$0xff]
        %v164 = vld [vmem:[%s117 + $0xd0] sm:$0xff]
        %v165 = vld [vmem:[%s117 + $0xd8] sm:$0xff]
        %v166 = vld [vmem:[%s117 + $0xe0] sm:$0xff]
        %v167 = vld [vmem:[%s117 + $0xe8] sm:$0xff]
        %v168 = vld [vmem:[%s117 + $0xf0] sm:$0xff]
        %v169 = vld [vmem:[%s117 + $0xf8] sm:$0xff]
        %v170 = vld [vmem:[%s117 + $0x100] sm:$0xff]
        %v171 = vld [vmem:[%s117 + $0x108] sm:$0xff]
        %v172 = vld [vmem:[%s117 + $0x110] sm:$0xff]
        %v173 = vld [vmem:[%s117 + $0x118] sm:$0xff]
        %v174 = vld [vmem:[%s117 + $0x120] sm:$0xff]
        %v175 = vld [vmem:[%s117 + $0x128] sm:$0xff]
        %v176 = vld [vmem:[%s117 + $0x130] sm:$0xff]
        %v177 = vld [vmem:[%s117 + $0x138] sm:$0xff]
        %v178 = vld [vmem:[%s117 + $0x140] sm:$0xff]
        %v179 = vld [vmem:[%s117 + $0x148] sm:$0xff]
        %v180 = vld [vmem:[%s117 + $0x150] sm:$0xff]
        %v181 = vld [vmem:[%s117 + $0x158] sm:$0xff]
        %v182 = vld [vmem:[%s117 + $0x160] sm:$0xff]
        %v183 = vld [vmem:[%s117 + $0x168] sm:$0xff]
        %v184 = vld [vmem:[%s117 + $0x170] sm:$0xff]
        %v185 = vld [vmem:[%s117 + $0x178] sm:$0xff]
        %v186 = vld [vmem:[%s117 + $0x180] sm:$0xff]
        %v187 = vld [vmem:[%s117 + $0x188] sm:$0xff]
        %v188 = vld [vmem:[%s117 + $0x190] sm:$0xff]
        %v189 = vld [vmem:[%s117 + $0x198] sm:$0xff]
        %v190 = vld [vmem:[%s117 + $0x1a0] sm:$0xff]
        %v191 = vld [vmem:[%s117 + $0x1a8] sm:$0xff]
        %v192 = vld [vmem:[%s117 + $0x1b0] sm:$0xff]
        %v193 = vld [vmem:[%s117 + $0x1b8] sm:$0xff]
        %v194 = vld [vmem:[%s117 + $0x1c0] sm:$0xff]
        %v195 = vld [vmem:[%s117 + $0x1c8] sm:$0xff]
        %v196 = vld [vmem:[%s117 + $0x1d0] sm:$0xff]
        %v197 = vld [vmem:[%s117 + $0x1d8] sm:$0xff]
        %v198 = vld [vmem:[%s117 + $0x1e0] sm:$0xff]
        %v199 = vld [vmem:[%s117 + $0x1e8] sm:$0xff]
        %v200 = vld [vmem:[%s117 + $0x1f0] sm:$0xff]
        %v201 = vld [vmem:[%s117 + $0x1f8] sm:$0xff]
        %v202 = vld [vmem:[%s117 + $0x200] sm:$0xff]
        %v203 = vld [vmem:[%s117 + $0x208] sm:$0xff]
        %v204 = vld [vmem:[%s117 + $0x210] sm:$0xff]
        %v205 = vld [vmem:[%s117 + $0x218] sm:$0xff]
        %v206 = vld [vmem:[%s117 + $0x220] sm:$0xff]
        %v207 = vld [vmem:[%s117 + $0x228] sm:$0xff]
        %v208 = vld [vmem:[%s117 + $0x230] sm:$0xff]
        %v209 = vld [vmem:[%s117 + $0x238] sm:$0xff]
        %v210 = vld [vmem:[%s117 + $0x240] sm:$0xff]
        %v211 = vld [vmem:[%s117 + $0x248] sm:$0xff]
        %v212 = vld [vmem:[%s117 + $0x250] sm:$0xff]
        %v213 = vld [vmem:[%s117 + $0x258] sm:$0xff]
        %v214 = vld [vmem:[%s117 + $0x260] sm:$0xff]
        %v215 = vld [vmem:[%s117 + $0x268] sm:$0xff]
        %v216 = vld [vmem:[%s117 + $0x270] sm:$0xff]
        %v217 = vld [vmem:[%s117 + $0x278] sm:$0xff]
        %v218 = vld [vmem:[%s117 + $0x280] sm:$0xff]
        %v219 = vld [vmem:[%s117 + $0x288] sm:$0xff]
        %v220 = vld [vmem:[%s117 + $0x290] sm:$0xff]
        %v221 = vld [vmem:[%s117 + $0x298] sm:$0xff]
        %v222 = vld [vmem:[%s117 + $0x2a0] sm:$0xff]
        %v223 = vld [vmem:[%s117 + $0x2a8] sm:$0xff]
        %v224 = vld [vmem:[%s117 + $0x2b0] sm:$0xff]
        %v225 = vld [vmem:[%s117 + $0x2b8] sm:$0xff]
        %v226 = vld [vmem:[%s117 + $0x2c0] sm:$0xff]
        %v227 = vld [vmem:[%s117 + $0x2c8] sm:$0xff]
        %v228 = vld [vmem:[%s117 + $0x2d0] sm:$0xff]
        %v229 = vld [vmem:[%s117 + $0x2d8] sm:$0xff]
        %v230 = vld [vmem:[%s117 + $0x2e0] sm:$0xff]
        %v231 = vld [vmem:[%s117 + $0x2e8] sm:$0xff]
        %v232 = vld [vmem:[%s117 + $0x2f0] sm:$0xff]
        %v233 = vld [vmem:[%s117 + $0x2f8] sm:$0xff]
        %v234 = vld [vmem:[%s117 + $0x300] sm:$0xff]
        %v235 = vld [vmem:[%s117 + $0x308] sm:$0xff]
        %v236 = vld [vmem:[%s117 + $0x310] sm:$0xff]
        %v237 = vld [vmem:[%s117 + $0x318] sm:$0xff]
        %v238 = vld [vmem:[%s117 + $0x320] sm:$0xff]
        %v239 = vld [vmem:[%s117 + $0x328] sm:$0xff]
        %v240 = vld [vmem:[%s117 + $0x330] sm:$0xff]
        %v241 = vld [vmem:[%s117 + $0x338] sm:$0xff]
        %v242 = vld [vmem:[%s117 + $0x340] sm:$0xff]
        %v243 = vld [vmem:[%s117 + $0x348] sm:$0xff]
        %v244 = vld [vmem:[%s117 + $0x350] sm:$0xff]
        %v245 = vld [vmem:[%s117 + $0x358] sm:$0xff]
        %v246 = vld [vmem:[%s117 + $0x360] sm:$0xff]
        %v247 = vld [vmem:[%s117 + $0x368] sm:$0xff]
        %v248 = vld [vmem:[%s117 + $0x370] sm:$0xff]
        %v249 = vld [vmem:[%s117 + $0x378] sm:$0xff]
        %v250 = vld [vmem:[%s117 + $0x380] sm:$0xff]
        %v251 = vld [vmem:[%s117 + $0x388] sm:$0xff]
        %v252 = vld [vmem:[%s117 + $0x390] sm:$0xff]
        %v253 = vld [vmem:[%s117 + $0x398] sm:$0xff]
        %v254 = vld [vmem:[%s117 + $0x3a0] sm:$0xff]
        %v255 = vld [vmem:[%s117 + $0x3a8] sm:$0xff]
        %v256 = vld [vmem:[%s117 + $0x3b0] sm:$0xff]
        %v257 = vld [vmem:[%s117 + $0x3b8] sm:$0xff]
        %v258 = vld [vmem:[%s117 + $0x3c0] sm:$0xff]
        %v259 = vld [vmem:[%s117 + $0x3c8] sm:$0xff]
        %v260 = vld [vmem:[%s117 + $0x3d0] sm:$0xff]
        %v261 = vld [vmem:[%s117 + $0x3d8] sm:$0xff]
        %v262 = vld [vmem:[%s117 + $0x3e0] sm:$0xff]
        %v263 = vld [vmem:[%s117 + $0x3e8] sm:$0xff]
        %v264 = vld [vmem:[%s117 + $0x3f0] sm:$0xff]
        %v265 = vld [vmem:[%s117 + $0x3f8] sm:$0xff]
        %v266 = vld [vmem:[%s117 + $0x400] sm:$0xff]
        %v267 = vld [vmem:[%s117 + $0x408] sm:$0xff]
        %v268 = vld [vmem:[%s117 + $0x410] sm:$0xff]
        %v269 = vld [vmem:[%s117 + $0x418] sm:$0xff]
        %v270 = vld [vmem:[%s117 + $0x420] sm:$0xff]
        %v271 = vld [vmem:[%s117 + $0x428] sm:$0xff]
        %v272 = vld [vmem:[%s117 + $0x430] sm:$0xff]
        %v273 = vld [vmem:[%s117 + $0x438] sm:$0xff]
        %v274 = vld [vmem:[%s117 + $0x440] sm:$0xff]
        %v275 = vld [vmem:[%s117 + $0x448] sm:$0xff]
        %v276 = vld [vmem:[%s117 + $0x450] sm:$0xff]
        %v277 = vld [vmem:[%s117 + $0x458] sm:$0xff]
        %v278 = vld [vmem:[%s117 + $0x460] sm:$0xff]
        %v279 = vld [vmem:[%s117 + $0x468] sm:$0xff]
        %v280 = vld [vmem:[%s117 + $0x470] sm:$0xff]
        %v281 = vld [vmem:[%s117 + $0x478] sm:$0xff]
        %v282 = vld [vmem:[%s117 + $0x480] sm:$0xff]
        %v283 = vld [vmem:[%s117 + $0x488] sm:$0xff]
        %v284 = vld [vmem:[%s117 + $0x490] sm:$0xff]
        %v285 = vld [vmem:[%s117 + $0x498] sm:$0xff]
        %v286 = vld [vmem:[%s117 + $0x4a0] sm:$0xff]
        %v287 = vld [vmem:[%s117 + $0x4a8] sm:$0xff]
        %v288 = vld [vmem:[%s117 + $0x4b0] sm:$0xff]
        %v289 = vld [vmem:[%s117 + $0x4b8] sm:$0xff]
        %v290 = vld [vmem:[%s117 + $0x4c0] sm:$0xff]
        %v291 = vld [vmem:[%s117 + $0x4c8] sm:$0xff]
        %v292 = vld [vmem:[%s117 + $0x4d0] sm:$0xff]
        %v293 = vld [vmem:[%s117 + $0x4d8] sm:$0xff]
        %v294 = vld [vmem:[%s117 + $0x4e0] sm:$0xff]
        %v295 = vld [vmem:[%s117 + $0x4e8] sm:$0xff]
        %v296 = vld [vmem:[%s117 + $0x4f0] sm:$0xff]
        %v297 = vld [vmem:[%s117 + $0x4f8] sm:$0xff]
        %v298 = vld [vmem:[%s117 + $0x500] sm:$0xff]
        %v299 = vld [vmem:[%s117 + $0x508] sm:$0xff]
        %v300 = vld [vmem:[%s117 + $0x510] sm:$0xff]
        %v301 = vld [vmem:[%s117 + $0x518] sm:$0xff]
        %v302 = vld [vmem:[%s117 + $0x520] sm:$0xff]
        %v303 = vld [vmem:[%s117 + $0x528] sm:$0xff]
        %v304 = vld [vmem:[%s117 + $0x530] sm:$0xff]
        %v305 = vld [vmem:[%s117 + $0x538] sm:$0xff]
        %v306 = vld [vmem:[%s117 + $0x540] sm:$0xff]
        %v307 = vld [vmem:[%s117 + $0x548] sm:$0xff]
        %v308 = vld [vmem:[%s117 + $0x550] sm:$0xff]
        %v309 = vld [vmem:[%s117 + $0x558] sm:$0xff]
        %v310 = vld [vmem:[%s117 + $0x560] sm:$0xff]
        %v311 = vld [vmem:[%s117 + $0x568] sm:$0xff]
        %v312 = vld [vmem:[%s117 + $0x570] sm:$0xff]
        %v313 = vld [vmem:[%s117 + $0x578] sm:$0xff]
        %v314 = vld [vmem:[%s117 + $0x580] sm:$0xff]
        %v315 = vld [vmem:[%s117 + $0x588] sm:$0xff]
        %v316 = vld [vmem:[%s117 + $0x590] sm:$0xff]
        %v317 = vld [vmem:[%s117 + $0x598] sm:$0xff]
        %v318 = vld [vmem:[%s117 + $0x5a0] sm:$0xff]
        %v319 = vld [vmem:[%s117 + $0x5a8] sm:$0xff]
        %v320 = vld [vmem:[%s117 + $0x5b0] sm:$0xff]
        %v321 = vld [vmem:[%s117 + $0x5b8] sm:$0xff]
        %v322 = vld [vmem:[%s117 + $0x5c0] sm:$0xff]
        %v323 = vld [vmem:[%s117 + $0x5c8] sm:$0xff]
        %v324 = vld [vmem:[%s117 + $0x5d0] sm:$0xff]
        %v325 = vld [vmem:[%s117 + $0x5d8] sm:$0xff]
        %v326 = vld [vmem:[%s117 + $0x5e0] sm:$0xff]
        %v327 = vld [vmem:[%s117 + $0x5e8] sm:$0xff]
        %v328 = vld [vmem:[%s117 + $0x5f0] sm:$0xff]
        %v329 = vld [vmem:[%s117 + $0x5f8] sm:$0xff]
        %v330 = vld [vmem:[%s117 + $0x600] sm:$0xff]
        %v331 = vld [vmem:[%s117 + $0x608] sm:$0xff]
        %v332 = vld [vmem:[%s117 + $0x610] sm:$0xff]
        %v333 = vld [vmem:[%s117 + $0x618] sm:$0xff]
        %v334 = vld [vmem:[%s117 + $0x620] sm:$0xff]
        %v335 = vld [vmem:[%s117 + $0x628] sm:$0xff]
        %v336 = vld [vmem:[%s117 + $0x630] sm:$0xff]
        %v337 = vld [vmem:[%s117 + $0x638] sm:$0xff]
        %v338 = vld [vmem:[%s117 + $0x640] sm:$0xff]
        %v339 = vld [vmem:[%s117 + $0x648] sm:$0xff]
        %v340 = vld [vmem:[%s117 + $0x650] sm:$0xff]
        %v341 = vld [vmem:[%s117 + $0x658] sm:$0xff]
        %v342 = vld [vmem:[%s117 + $0x660] sm:$0xff]
        %v343 = vld [vmem:[%s117 + $0x668] sm:$0xff]
        %v344 = vld [vmem:[%s117 + $0x670] sm:$0xff]
        %v345 = vld [vmem:[%s117 + $0x678] sm:$0xff]
        %v346 = vld [vmem:[%s117 + $0x680] sm:$0xff]
        %v347 = vld [vmem:[%s117 + $0x688] sm:$0xff]
        %v348 = vld [vmem:[%s117 + $0x690] sm:$0xff]
        %v349 = vld [vmem:[%s117 + $0x698] sm:$0xff]
        %v350 = vld [vmem:[%s117 + $0x6a0] sm:$0xff]
        %v351 = vld [vmem:[%s117 + $0x6a8] sm:$0xff]
        %v352 = vld [vmem:[%s117 + $0x6b0] sm:$0xff]
        %v353 = vld [vmem:[%s117 + $0x6b8] sm:$0xff]
        %v354 = vld [vmem:[%s117 + $0x6c0] sm:$0xff]
        %v355 = vld [vmem:[%s117 + $0x6c8] sm:$0xff]
        %v356 = vld [vmem:[%s117 + $0x6d0] sm:$0xff]
        %v357 = vld [vmem:[%s117 + $0x6d8] sm:$0xff]
        %v358 = vld [vmem:[%s117 + $0x6e0] sm:$0xff]
        %v359 = vld [vmem:[%s117 + $0x6e8] sm:$0xff]
        %v360 = vld [vmem:[%s117 + $0x6f0] sm:$0xff]
        %v361 = vld [vmem:[%s117 + $0x6f8] sm:$0xff]
        %v362 = vld [vmem:[%s117 + $0x700] sm:$0xff]
        %v363 = vld [vmem:[%s117 + $0x708] sm:$0xff]
        %v364 = vld [vmem:[%s117 + $0x710] sm:$0xff]
        %v365 = vld [vmem:[%s117 + $0x718] sm:$0xff]
        %v366 = vld [vmem:[%s117 + $0x720] sm:$0xff]
        %v367 = vld [vmem:[%s117 + $0x728] sm:$0xff]
        %v368 = vld [vmem:[%s117 + $0x730] sm:$0xff]
        %v369 = vld [vmem:[%s117 + $0x738] sm:$0xff]
        %v370 = vld [vmem:[%s117 + $0x740] sm:$0xff]
        %v371 = vld [vmem:[%s117 + $0x748] sm:$0xff]
        %v372 = vld [vmem:[%s117 + $0x750] sm:$0xff]
        %v373 = vld [vmem:[%s117 + $0x758] sm:$0xff]
        %v374 = vld [vmem:[%s117 + $0x760] sm:$0xff]
        %v375 = vld [vmem:[%s117 + $0x768] sm:$0xff]
        %v376 = vld [vmem:[%s117 + $0x770] sm:$0xff]
        %v377 = vld [vmem:[%s117 + $0x778] sm:$0xff]
        %v378 = vld [vmem:[%s117 + $0x780] sm:$0xff]
        %v379 = vld [vmem:[%s117 + $0x788] sm:$0xff]
        %v380 = vld [vmem:[%s117 + $0x790] sm:$0xff]
        %v381 = vld [vmem:[%s117 + $0x798] sm:$0xff]
        %v382 = vld [vmem:[%s117 + $0x7a0] sm:$0xff]
        %v383 = vld [vmem:[%s117 + $0x7a8] sm:$0xff]
        %v384 = vld [vmem:[%s117 + $0x7b0] sm:$0xff]
        %v385 = vld [vmem:[%s117 + $0x7b8] sm:$0xff]
        %v386 = vld [vmem:[%s117 + $0x7c0] sm:$0xff]
        %v387 = vld [vmem:[%s117 + $0x7c8] sm:$0xff]
        %v388 = vld [vmem:[%s117 + $0x7d0] sm:$0xff]
        %v389 = vld [vmem:[%s117 + $0x7d8] sm:$0xff]
        %v390 = vld [vmem:[%s117 + $0x7e0] sm:$0xff]
        %v391 = vld [vmem:[%s117 + $0x7e8] sm:$0xff]
        %v392 = vld [vmem:[%s117 + $0x7f0] sm:$0xff]
        %v393 = vld [vmem:[%s117 + $0x7f8] sm:$0xff]
        %v394 = vmax.f32 %v138, 0.0
        %v395 = vmax.f32 %v139, 0.0
        %v396 = vmax.f32 %v140, 0.0
        %v397 = vmax.f32 %v141, 0.0
        %v398 = vmax.f32 %v142, 0.0
        %v399 = vmax.f32 %v143, 0.0
        %v400 = vmax.f32 %v144, 0.0
        %v401 = vmax.f32 %v145, 0.0
        %v402 = vmax.f32 %v146, 0.0
        %v403 = vmax.f32 %v147, 0.0
        %v404 = vmax.f32 %v148, 0.0
        %v405 = vmax.f32 %v149, 0.0
        %v406 = vmax.f32 %v150, 0.0
        %v407 = vmax.f32 %v151, 0.0
        %v408 = vmax.f32 %v152, 0.0
        %v409 = vmax.f32 %v153, 0.0
        %v410 = vmax.f32 %v154, 0.0
        %v411 = vmax.f32 %v155, 0.0
        %v412 = vmax.f32 %v156, 0.0
        %v413 = vmax.f32 %v157, 0.0
        %v414 = vmax.f32 %v158, 0.0
        %v415 = vmax.f32 %v159, 0.0
        %v416 = vmax.f32 %v160, 0.0
        %v417 = vmax.f32 %v161, 0.0
        %v418 = vmax.f32 %v162, 0.0
        %v419 = vmax.f32 %v163, 0.0
        %v420 = vmax.f32 %v164, 0.0
        %v421 = vmax.f32 %v165, 0.0
        %v422 = vmax.f32 %v166, 0.0
        %v423 = vmax.f32 %v167, 0.0
        %v424 = vmax.f32 %v168, 0.0
        %v425 = vmax.f32 %v169, 0.0
        %v426 = vmax.f32 %v170, 0.0
        %v427 = vmax.f32 %v171, 0.0
        %v428 = vmax.f32 %v172, 0.0
        %v429 = vmax.f32 %v173, 0.0
        %v430 = vmax.f32 %v174, 0.0
        %v431 = vmax.f32 %v175, 0.0
        %v432 = vmax.f32 %v176, 0.0
        %v433 = vmax.f32 %v177, 0.0
        %v434 = vmax.f32 %v178, 0.0
        %v435 = vmax.f32 %v179, 0.0
        %v436 = vmax.f32 %v180, 0.0
        %v437 = vmax.f32 %v181, 0.0
        %v438 = vmax.f32 %v182, 0.0
        %v439 = vmax.f32 %v183, 0.0
        %v440 = vmax.f32 %v184, 0.0
        %v441 = vmax.f32 %v185, 0.0
        %v442 = vmax.f32 %v186, 0.0
        %v443 = vmax.f32 %v187, 0.0
        %v444 = vmax.f32 %v188, 0.0
        %v445 = vmax.f32 %v189, 0.0
        %v446 = vmax.f32 %v190, 0.0
        %v447 = vmax.f32 %v191, 0.0
        %v448 = vmax.f32 %v192, 0.0
        %v449 = vmax.f32 %v193, 0.0
        %v450 = vmax.f32 %v194, 0.0
        %v451 = vmax.f32 %v195, 0.0
        %v452 = vmax.f32 %v196, 0.0
        %v453 = vmax.f32 %v197, 0.0
        %v454 = vmax.f32 %v198, 0.0
        %v455 = vmax.f32 %v199, 0.0
        %v456 = vmax.f32 %v200, 0.0
        %v457 = vmax.f32 %v201, 0.0
        %v458 = vmax.f32 %v202, 0.0
        %v459 = vmax.f32 %v203, 0.0
        %v460 = vmax.f32 %v204, 0.0
        %v461 = vmax.f32 %v205, 0.0
        %v462 = vmax.f32 %v206, 0.0
        %v463 = vmax.f32 %v207, 0.0
        %v464 = vmax.f32 %v208, 0.0
        %v465 = vmax.f32 %v209, 0.0
        %v466 = vmax.f32 %v210, 0.0
        %v467 = vmax.f32 %v211, 0.0
        %v468 = vmax.f32 %v212, 0.0
        %v469 = vmax.f32 %v213, 0.0
        %v470 = vmax.f32 %v214, 0.0
        %v471 = vmax.f32 %v215, 0.0
        %v472 = vmax.f32 %v216, 0.0
        %v473 = vmax.f32 %v217, 0.0
        %v474 = vmax.f32 %v218, 0.0
        %v475 = vmax.f32 %v219, 0.0
        %v476 = vmax.f32 %v220, 0.0
        %v477 = vmax.f32 %v221, 0.0
        %v478 = vmax.f32 %v222, 0.0
        %v479 = vmax.f32 %v223, 0.0
        %v480 = vmax.f32 %v224, 0.0
        %v481 = vmax.f32 %v225, 0.0
        %v482 = vmax.f32 %v226, 0.0
        %v483 = vmax.f32 %v227, 0.0
        %v484 = vmax.f32 %v228, 0.0
        %v485 = vmax.f32 %v229, 0.0
        %v486 = vmax.f32 %v230, 0.0
        %v487 = vmax.f32 %v231, 0.0
        %v488 = vmax.f32 %v232, 0.0
        %v489 = vmax.f32 %v233, 0.0
        %v490 = vmax.f32 %v234, 0.0
        %v491 = vmax.f32 %v235, 0.0
        %v492 = vmax.f32 %v236, 0.0
        %v493 = vmax.f32 %v237, 0.0
        %v494 = vmax.f32 %v238, 0.0
        %v495 = vmax.f32 %v239, 0.0
        %v496 = vmax.f32 %v240, 0.0
        %v497 = vmax.f32 %v241, 0.0
        %v498 = vmax.f32 %v242, 0.0
        %v499 = vmax.f32 %v243, 0.0
        %v500 = vmax.f32 %v244, 0.0
        %v501 = vmax.f32 %v245, 0.0
        %v502 = vmax.f32 %v246, 0.0
        %v503 = vmax.f32 %v247, 0.0
        %v504 = vmax.f32 %v248, 0.0
        %v505 = vmax.f32 %v249, 0.0
        %v506 = vmax.f32 %v250, 0.0
        %v507 = vmax.f32 %v251, 0.0
        %v508 = vmax.f32 %v252, 0.0
        %v509 = vmax.f32 %v253, 0.0
        %v510 = vmax.f32 %v254, 0.0
        %v511 = vmax.f32 %v255, 0.0
        %v512 = vmax.f32 %v256, 0.0
        %v513 = vmax.f32 %v257, 0.0
        %v514 = vmax.f32 %v258, 0.0
        %v515 = vmax.f32 %v259, 0.0
        %v516 = vmax.f32 %v260, 0.0
        %v517 = vmax.f32 %v261, 0.0
        %v518 = vmax.f32 %v262, 0.0
        %v519 = vmax.f32 %v263, 0.0
        %v520 = vmax.f32 %v264, 0.0
        %v521 = vmax.f32 %v265, 0.0
        %v522 = vmax.f32 %v266, 0.0
        %v523 = vmax.f32 %v267, 0.0
        %v524 = vmax.f32 %v268, 0.0
        %v525 = vmax.f32 %v269, 0.0
        %v526 = vmax.f32 %v270, 0.0
        %v527 = vmax.f32 %v271, 0.0
        %v528 = vmax.f32 %v272, 0.0
        %v529 = vmax.f32 %v273, 0.0
        %v530 = vmax.f32 %v274, 0.0
        %v531 = vmax.f32 %v275, 0.0
        %v532 = vmax.f32 %v276, 0.0
        %v533 = vmax.f32 %v277, 0.0
        %v534 = vmax.f32 %v278, 0.0
        %v535 = vmax.f32 %v279, 0.0
        %v536 = vmax.f32 %v280, 0.0
        %v537 = vmax.f32 %v281, 0.0
        %v538 = vmax.f32 %v282, 0.0
        %v539 = vmax.f32 %v283, 0.0
        %v540 = vmax.f32 %v284, 0.0
        %v541 = vmax.f32 %v285, 0.0
        %v542 = vmax.f32 %v286, 0.0
        %v543 = vmax.f32 %v287, 0.0
        %v544 = vmax.f32 %v288, 0.0
        %v545 = vmax.f32 %v289, 0.0
        %v546 = vmax.f32 %v290, 0.0
        %v547 = vmax.f32 %v291, 0.0
        %v548 = vmax.f32 %v292, 0.0
        %v549 = vmax.f32 %v293, 0.0
        %v550 = vmax.f32 %v294, 0.0
        %v551 = vmax.f32 %v295, 0.0
        %v552 = vmax.f32 %v296, 0.0
        %v553 = vmax.f32 %v297, 0.0
        %v554 = vmax.f32 %v298, 0.0
        %v555 = vmax.f32 %v299, 0.0
        %v556 = vmax.f32 %v300, 0.0
        %v557 = vmax.f32 %v301, 0.0
        %v558 = vmax.f32 %v302, 0.0
        %v559 = vmax.f32 %v303, 0.0
        %v560 = vmax.f32 %v304, 0.0
        %v561 = vmax.f32 %v305, 0.0
        %v562 = vmax.f32 %v306, 0.0
        %v563 = vmax.f32 %v307, 0.0
        %v564 = vmax.f32 %v308, 0.0
        %v565 = vmax.f32 %v309, 0.0
        %v566 = vmax.f32 %v310, 0.0
        %v567 = vmax.f32 %v311, 0.0
        %v568 = vmax.f32 %v312, 0.0
        %v569 = vmax.f32 %v313, 0.0
        %v570 = vmax.f32 %v314, 0.0
        %v571 = vmax.f32 %v315, 0.0
        %v572 = vmax.f32 %v316, 0.0
        %v573 = vmax.f32 %v317, 0.0
        %v574 = vmax.f32 %v318, 0.0
        %v575 = vmax.f32 %v319, 0.0
        %v576 = vmax.f32 %v320, 0.0
        %v577 = vmax.f32 %v321, 0.0
        %v578 = vmax.f32 %v322, 0.0
        %v579 = vmax.f32 %v323, 0.0
        %v580 = vmax.f32 %v324, 0.0
        %v581 = vmax.f32 %v325, 0.0
        %v582 = vmax.f32 %v326, 0.0
        %v583 = vmax.f32 %v327, 0.0
        %v584 = vmax.f32 %v328, 0.0
        %v585 = vmax.f32 %v329, 0.0
        %v586 = vmax.f32 %v330, 0.0
        %v587 = vmax.f32 %v331, 0.0
        %v588 = vmax.f32 %v332, 0.0
        %v589 = vmax.f32 %v333, 0.0
        %v590 = vmax.f32 %v334, 0.0
        %v591 = vmax.f32 %v335, 0.0
        %v592 = vmax.f32 %v336, 0.0
        %v593 = vmax.f32 %v337, 0.0
        %v594 = vmax.f32 %v338, 0.0
        %v595 = vmax.f32 %v339, 0.0
        %v596 = vmax.f32 %v340, 0.0
        %v597 = vmax.f32 %v341, 0.0
        %v598 = vmax.f32 %v342, 0.0
        %v599 = vmax.f32 %v343, 0.0
        %v600 = vmax.f32 %v344, 0.0
        %v601 = vmax.f32 %v345, 0.0
        %v602 = vmax.f32 %v346, 0.0
        %v603 = vmax.f32 %v347, 0.0
        %v604 = vmax.f32 %v348, 0.0
        %v605 = vmax.f32 %v349, 0.0
        %v606 = vmax.f32 %v350, 0.0
        %v607 = vmax.f32 %v351, 0.0
        %v608 = vmax.f32 %v352, 0.0
        %v609 = vmax.f32 %v353, 0.0
        %v610 = vmax.f32 %v354, 0.0
        %v611 = vmax.f32 %v355, 0.0
        %v612 = vmax.f32 %v356, 0.0
        %v613 = vmax.f32 %v357, 0.0
        %v614 = vmax.f32 %v358, 0.0
        %v615 = vmax.f32 %v359, 0.0
        %v616 = vmax.f32 %v360, 0.0
        %v617 = vmax.f32 %v361, 0.0
        %v618 = vmax.f32 %v362, 0.0
        %v619 = vmax.f32 %v363, 0.0
        %v620 = vmax.f32 %v364, 0.0
        %v621 = vmax.f32 %v365, 0.0
        %v622 = vmax.f32 %v366, 0.0
        %v623 = vmax.f32 %v367, 0.0
        %v624 = vmax.f32 %v368, 0.0
        %v625 = vmax.f32 %v369, 0.0
        %v626 = vmax.f32 %v370, 0.0
        %v627 = vmax.f32 %v371, 0.0
        %v628 = vmax.f32 %v372, 0.0
        %v629 = vmax.f32 %v373, 0.0
        %v630 = vmax.f32 %v374, 0.0
        %v631 = vmax.f32 %v375, 0.0
        %v632 = vmax.f32 %v376, 0.0
        %v633 = vmax.f32 %v377, 0.0
        %v634 = vmax.f32 %v378, 0.0
        %v635 = vmax.f32 %v379, 0.0
        %v636 = vmax.f32 %v380, 0.0
        %v637 = vmax.f32 %v381, 0.0
        %v638 = vmax.f32 %v382, 0.0
        %v639 = vmax.f32 %v383, 0.0
        %v640 = vmax.f32 %v384, 0.0
        %v641 = vmax.f32 %v385, 0.0
        %v642 = vmax.f32 %v386, 0.0
        %v643 = vmax.f32 %v387, 0.0
        %v644 = vmax.f32 %v388, 0.0
        %v645 = vmax.f32 %v389, 0.0
        %v646 = vmax.f32 %v390, 0.0
        %v647 = vmax.f32 %v391, 0.0
        %v648 = vmax.f32 %v392, 0.0
        %v649 = vmax.f32 %v393, 0.0
        %v650 = vmin.f32 %v394, 1.0
        %v651 = vmin.f32 %v395, 1.0
        %v652 = vmin.f32 %v396, 1.0
        %v653 = vmin.f32 %v397, 1.0
        %v654 = vmin.f32 %v398, 1.0
        %v655 = vmin.f32 %v399, 1.0
        %v656 = vmin.f32 %v400, 1.0
        %v657 = vmin.f32 %v401, 1.0
        %v658 = vmin.f32 %v402, 1.0
        %v659 = vmin.f32 %v403, 1.0
        %v660 = vmin.f32 %v404, 1.0
        %v661 = vmin.f32 %v405, 1.0
        %v662 = vmin.f32 %v406, 1.0
        %v663 = vmin.f32 %v407, 1.0
        %v664 = vmin.f32 %v408, 1.0
        %v665 = vmin.f32 %v409, 1.0
        %v666 = vmin.f32 %v410, 1.0
        %v667 = vmin.f32 %v411, 1.0
        %v668 = vmin.f32 %v412, 1.0
        %v669 = vmin.f32 %v413, 1.0
        %v670 = vmin.f32 %v414, 1.0
        %v671 = vmin.f32 %v415, 1.0
        %v672 = vmin.f32 %v416, 1.0
        %v673 = vmin.f32 %v417, 1.0
        %v674 = vmin.f32 %v418, 1.0
        %v675 = vmin.f32 %v419, 1.0
        %v676 = vmin.f32 %v420, 1.0
        %v677 = vmin.f32 %v421, 1.0
        %v678 = vmin.f32 %v422, 1.0
        %v679 = vmin.f32 %v423, 1.0
        %v680 = vmin.f32 %v424, 1.0
        %v681 = vmin.f32 %v425, 1.0
        %v682 = vmin.f32 %v426, 1.0
        %v683 = vmin.f32 %v427, 1.0
        %v684 = vmin.f32 %v428, 1.0
        %v685 = vmin.f32 %v429, 1.0
        %v686 = vmin.f32 %v430, 1.0
        %v687 = vmin.f32 %v431, 1.0
        %v688 = vmin.f32 %v432, 1.0
        %v689 = vmin.f32 %v433, 1.0
        %v690 = vmin.f32 %v434, 1.0
        %v691 = vmin.f32 %v435, 1.0
        %v692 = vmin.f32 %v436, 1.0
        %v693 = vmin.f32 %v437, 1.0
        %v694 = vmin.f32 %v438, 1.0
        %v695 = vmin.f32 %v439, 1.0
        %v696 = vmin.f32 %v440, 1.0
        %v697 = vmin.f32 %v441, 1.0
        %v698 = vmin.f32 %v442, 1.0
        %v699 = vmin.f32 %v443, 1.0
        %v700 = vmin.f32 %v444, 1.0
        %v701 = vmin.f32 %v445, 1.0
        %v702 = vmin.f32 %v446, 1.0
        %v703 = vmin.f32 %v447, 1.0
        %v704 = vmin.f32 %v448, 1.0
        %v705 = vmin.f32 %v449, 1.0
        %v706 = vmin.f32 %v450, 1.0
        %v707 = vmin.f32 %v451, 1.0
        %v708 = vmin.f32 %v452, 1.0
        %v709 = vmin.f32 %v453, 1.0
        %v710 = vmin.f32 %v454, 1.0
        %v711 = vmin.f32 %v455, 1.0
        %v712 = vmin.f32 %v456, 1.0
        %v713 = vmin.f32 %v457, 1.0
        %v714 = vmin.f32 %v458, 1.0
        %v715 = vmin.f32 %v459, 1.0
        %v716 = vmin.f32 %v460, 1.0
        %v717 = vmin.f32 %v461, 1.0
        %v718 = vmin.f32 %v462, 1.0
        %v719 = vmin.f32 %v463, 1.0
        %v720 = vmin.f32 %v464, 1.0
        %v721 = vmin.f32 %v465, 1.0
        %v722 = vmin.f32 %v466, 1.0
        %v723 = vmin.f32 %v467, 1.0
        %v724 = vmin.f32 %v468, 1.0
        %v725 = vmin.f32 %v469, 1.0
        %v726 = vmin.f32 %v470, 1.0
        %v727 = vmin.f32 %v471, 1.0
        %v728 = vmin.f32 %v472, 1.0
        %v729 = vmin.f32 %v473, 1.0
        %v730 = vmin.f32 %v474, 1.0
        %v731 = vmin.f32 %v475, 1.0
        %v732 = vmin.f32 %v476, 1.0
        %v733 = vmin.f32 %v477, 1.0
        %v734 = vmin.f32 %v478, 1.0
        %v735 = vmin.f32 %v479, 1.0
        %v736 = vmin.f32 %v480, 1.0
        %v737 = vmin.f32 %v481, 1.0
        %v738 = vmin.f32 %v482, 1.0
        %v739 = vmin.f32 %v483, 1.0
        %v740 = vmin.f32 %v484, 1.0
        %v741 = vmin.f32 %v485, 1.0
        %v742 = vmin.f32 %v486, 1.0
        %v743 = vmin.f32 %v487, 1.0
        %v744 = vmin.f32 %v488, 1.0
        %v745 = vmin.f32 %v489, 1.0
        %v746 = vmin.f32 %v490, 1.0
        %v747 = vmin.f32 %v491, 1.0
        %v748 = vmin.f32 %v492, 1.0
        %v749 = vmin.f32 %v493, 1.0
        %v750 = vmin.f32 %v494, 1.0
        %v751 = vmin.f32 %v495, 1.0
        %v752 = vmin.f32 %v496, 1.0
        %v753 = vmin.f32 %v497, 1.0
        %v754 = vmin.f32 %v498, 1.0
        %v755 = vmin.f32 %v499, 1.0
        %v756 = vmin.f32 %v500, 1.0
        %v757 = vmin.f32 %v501, 1.0
        %v758 = vmin.f32 %v502, 1.0
        %v759 = vmin.f32 %v503, 1.0
        %v760 = vmin.f32 %v504, 1.0
        %v761 = vmin.f32 %v505, 1.0
        %v762 = vmin.f32 %v506, 1.0
        %v763 = vmin.f32 %v507, 1.0
        %v764 = vmin.f32 %v508, 1.0
        %v765 = vmin.f32 %v509, 1.0
        %v766 = vmin.f32 %v510, 1.0
        %v767 = vmin.f32 %v511, 1.0
        %v768 = vmin.f32 %v512, 1.0
        %v769 = vmin.f32 %v513, 1.0
        %v770 = vmin.f32 %v514, 1.0
        %v771 = vmin.f32 %v515, 1.0
        %v772 = vmin.f32 %v516, 1.0
        %v773 = vmin.f32 %v517, 1.0
        %v774 = vmin.f32 %v518, 1.0
        %v775 = vmin.f32 %v519, 1.0
        %v776 = vmin.f32 %v520, 1.0
        %v777 = vmin.f32 %v521, 1.0
        %v778 = vmin.f32 %v522, 1.0
        %v779 = vmin.f32 %v523, 1.0
        %v780 = vmin.f32 %v524, 1.0
        %v781 = vmin.f32 %v525, 1.0
        %v782 = vmin.f32 %v526, 1.0
        %v783 = vmin.f32 %v527, 1.0
        %v784 = vmin.f32 %v528, 1.0
        %v785 = vmin.f32 %v529, 1.0
        %v786 = vmin.f32 %v530, 1.0
        %v787 = vmin.f32 %v531, 1.0
        %v788 = vmin.f32 %v532, 1.0
        %v789 = vmin.f32 %v533, 1.0
        %v790 = vmin.f32 %v534, 1.0
        %v791 = vmin.f32 %v535, 1.0
        %v792 = vmin.f32 %v536, 1.0
        %v793 = vmin.f32 %v537, 1.0
        %v794 = vmin.f32 %v538, 1.0
        %v795 = vmin.f32 %v539, 1.0
        %v796 = vmin.f32 %v540, 1.0
        %v797 = vmin.f32 %v541, 1.0
        %v798 = vmin.f32 %v542, 1.0
        %v799 = vmin.f32 %v543, 1.0
        %v800 = vmin.f32 %v544, 1.0
        %v801 = vmin.f32 %v545, 1.0
        %v802 = vmin.f32 %v546, 1.0
        %v803 = vmin.f32 %v547, 1.0
        %v804 = vmin.f32 %v548, 1.0
        %v805 = vmin.f32 %v549, 1.0
        %v806 = vmin.f32 %v550, 1.0
        %v807 = vmin.f32 %v551, 1.0
        %v808 = vmin.f32 %v552, 1.0
        %v809 = vmin.f32 %v553, 1.0
        %v810 = vmin.f32 %v554, 1.0
        %v811 = vmin.f32 %v555, 1.0
        %v812 = vmin.f32 %v556, 1.0
        %v813 = vmin.f32 %v557, 1.0
        %v814 = vmin.f32 %v558, 1.0
        %v815 = vmin.f32 %v559, 1.0
        %v816 = vmin.f32 %v560, 1.0
        %v817 = vmin.f32 %v561, 1.0
        %v818 = vmin.f32 %v562, 1.0
        %v819 = vmin.f32 %v563, 1.0
        %v820 = vmin.f32 %v564, 1.0
        %v821 = vmin.f32 %v565, 1.0
        %v822 = vmin.f32 %v566, 1.0
        %v823 = vmin.f32 %v567, 1.0
        %v824 = vmin.f32 %v568, 1.0
        %v825 = vmin.f32 %v569, 1.0
        %v826 = vmin.f32 %v570, 1.0
        %v827 = vmin.f32 %v571, 1.0
        %v828 = vmin.f32 %v572, 1.0
        %v829 = vmin.f32 %v573, 1.0
        %v830 = vmin.f32 %v574, 1.0
        %v831 = vmin.f32 %v575, 1.0
        %v832 = vmin.f32 %v576, 1.0
        %v833 = vmin.f32 %v577, 1.0
        %v834 = vmin.f32 %v578, 1.0
        %v835 = vmin.f32 %v579, 1.0
        %v836 = vmin.f32 %v580, 1.0
        %v837 = vmin.f32 %v581, 1.0
        %v838 = vmin.f32 %v582, 1.0
        %v839 = vmin.f32 %v583, 1.0
        %v840 = vmin.f32 %v584, 1.0
        %v841 = vmin.f32 %v585, 1.0
        %v842 = vmin.f32 %v586, 1.0
        %v843 = vmin.f32 %v587, 1.0
        %v844 = vmin.f32 %v588, 1.0
        %v845 = vmin.f32 %v589, 1.0
        %v846 = vmin.f32 %v590, 1.0
        %v847 = vmin.f32 %v591, 1.0
        %v848 = vmin.f32 %v592, 1.0
        %v849 = vmin.f32 %v593, 1.0
        %v850 = vmin.f32 %v594, 1.0
        %v851 = vmin.f32 %v595, 1.0
        %v852 = vmin.f32 %v596, 1.0
        %v853 = vmin.f32 %v597, 1.0
        %v854 = vmin.f32 %v598, 1.0
        %v855 = vmin.f32 %v599, 1.0
        %v856 = vmin.f32 %v600, 1.0
        %v857 = vmin.f32 %v601, 1.0
        %v858 = vmin.f32 %v602, 1.0
        %v859 = vmin.f32 %v603, 1.0
        %v860 = vmin.f32 %v604, 1.0
        %v861 = vmin.f32 %v605, 1.0
        %v862 = vmin.f32 %v606, 1.0
        %v863 = vmin.f32 %v607, 1.0
        %v864 = vmin.f32 %v608, 1.0
        %v865 = vmin.f32 %v609, 1.0
        %v866 = vmin.f32 %v610, 1.0
        %v867 = vmin.f32 %v611, 1.0
        %v868 = vmin.f32 %v612, 1.0
        %v869 = vmin.f32 %v613, 1.0
        %v870 = vmin.f32 %v614, 1.0
        %v871 = vmin.f32 %v615, 1.0
        %v872 = vmin.f32 %v616, 1.0
        %v873 = vmin.f32 %v617, 1.0
        %v874 = vmin.f32 %v618, 1.0
        %v875 = vmin.f32 %v619, 1.0
        %v876 = vmin.f32 %v620, 1.0
        %v877 = vmin.f32 %v621, 1.0
        %v878 = vmin.f32 %v622, 1.0
        %v879 = vmin.f32 %v623, 1.0
        %v880 = vmin.f32 %v624, 1.0
        %v881 = vmin.f32 %v625, 1.0
        %v882 = vmin.f32 %v626, 1.0
        %v883 = vmin.f32 %v627, 1.0
        %v884 = vmin.f32 %v628, 1.0
        %v885 = vmin.f32 %v629, 1.0
        %v886 = vmin.f32 %v630, 1.0
        %v887 = vmin.f32 %v631, 1.0
        %v888 = vmin.f32 %v632, 1.0
        %v889 = vmin.f32 %v633, 1.0
        %v890 = vmin.f32 %v634, 1.0
        %v891 = vmin.f32 %v635, 1.0
        %v892 = vmin.f32 %v636, 1.0
        %v893 = vmin.f32 %v637, 1.0
        %v894 = vmin.f32 %v638, 1.0
        %v895 = vmin.f32 %v639, 1.0
        %v896 = vmin.f32 %v640, 1.0
        %v897 = vmin.f32 %v641, 1.0
        %v898 = vmin.f32 %v642, 1.0
        %v899 = vmin.f32 %v643, 1.0
        %v900 = vmin.f32 %v644, 1.0
        %v901 = vmin.f32 %v645, 1.0
        %v902 = vmin.f32 %v646, 1.0
        %v903 = vmin.f32 %v647, 1.0
        %v904 = vmin.f32 %v648, 1.0
        %v905 = vmin.f32 %v649, 1.0
        %906 = vst [vmem:[%s135] sm:$0xff] %v650
        %907 = vst [vmem:[%s135 + $0x8] sm:$0xff] %v651
        %908 = vst [vmem:[%s135 + $0x10] sm:$0xff] %v652
        %909 = vst [vmem:[%s135 + $0x18] sm:$0xff] %v653
        %910 = vst [vmem:[%s135 + $0x20] sm:$0xff] %v654
        %911 = vst [vmem:[%s135 + $0x28] sm:$0xff] %v655
        %912 = vst [vmem:[%s135 + $0x30] sm:$0xff] %v656
        %913 = vst [vmem:[%s135 + $0x38] sm:$0xff] %v657
        %914 = vst [vmem:[%s135 + $0x40] sm:$0xff] %v658
        %915 = vst [vmem:[%s135 + $0x48] sm:$0xff] %v659
        %916 = vst [vmem:[%s135 + $0x50] sm:$0xff] %v660
        %917 = vst [vmem:[%s135 + $0x58] sm:$0xff] %v661
        %918 = vst [vmem:[%s135 + $0x60] sm:$0xff] %v662
        %919 = vst [vmem:[%s135 + $0x68] sm:$0xff] %v663
        %920 = vst [vmem:[%s135 + $0x70] sm:$0xff] %v664
        %921 = vst [vmem:[%s135 + $0x78] sm:$0xff] %v665
        %922 = vst [vmem:[%s135 + $0x80] sm:$0xff] %v666
        %923 = vst [vmem:[%s135 + $0x88] sm:$0xff] %v667
        %924 = vst [vmem:[%s135 + $0x90] sm:$0xff] %v668
        %925 = vst [vmem:[%s135 + $0x98] sm:$0xff] %v669
        %926 = vst [vmem:[%s135 + $0xa0] sm:$0xff] %v670
        %927 = vst [vmem:[%s135 + $0xa8] sm:$0xff] %v671
        %928 = vst [vmem:[%s135 + $0xb0] sm:$0xff] %v672
        %929 = vst [vmem:[%s135 + $0xb8] sm:$0xff] %v673
        %930 = vst [vmem:[%s135 + $0xc0] sm:$0xff] %v674
        %931 = vst [vmem:[%s135 + $0xc8] sm:$0xff] %v675
        %932 = vst [vmem:[%s135 + $0xd0] sm:$0xff] %v676
        %933 = vst [vmem:[%s135 + $0xd8] sm:$0xff] %v677
        %934 = vst [vmem:[%s135 + $0xe0] sm:$0xff] %v678
        %935 = vst [vmem:[%s135 + $0xe8] sm:$0xff] %v679
        %936 = vst [vmem:[%s135 + $0xf0] sm:$0xff] %v680
        %937 = vst [vmem:[%s135 + $0xf8] sm:$0xff] %v681
        %938 = vst [vmem:[%s135 + $0x100] sm:$0xff] %v682
        %939 = vst [vmem:[%s135 + $0x108] sm:$0xff] %v683
        %940 = vst [vmem:[%s135 + $0x110] sm:$0xff] %v684
        %941 = vst [vmem:[%s135 + $0x118] sm:$0xff] %v685
        %942 = vst [vmem:[%s135 + $0x120] sm:$0xff] %v686
        %943 = vst [vmem:[%s135 + $0x128] sm:$0xff] %v687
        %944 = vst [vmem:[%s135 + $0x130] sm:$0xff] %v688
        %945 = vst [vmem:[%s135 + $0x138] sm:$0xff] %v689
        %946 = vst [vmem:[%s135 + $0x140] sm:$0xff] %v690
        %947 = vst [vmem:[%s135 + $0x148] sm:$0xff] %v691
        %948 = vst [vmem:[%s135 + $0x150] sm:$0xff] %v692
        %949 = vst [vmem:[%s135 + $0x158] sm:$0xff] %v693
        %950 = vst [vmem:[%s135 + $0x160] sm:$0xff] %v694
        %951 = vst [vmem:[%s135 + $0x168] sm:$0xff] %v695
        %952 = vst [vmem:[%s135 + $0x170] sm:$0xff] %v696
        %953 = vst [vmem:[%s135 + $0x178] sm:$0xff] %v697
        %954 = vst [vmem:[%s135 + $0x180] sm:$0xff] %v698
        %955 = vst [vmem:[%s135 + $0x188] sm:$0xff] %v699
        %956 = vst [vmem:[%s135 + $0x190] sm:$0xff] %v700
        %957 = vst [vmem:[%s135 + $0x198] sm:$0xff] %v701
        %958 = vst [vmem:[%s135 + $0x1a0] sm:$0xff] %v702
        %959 = vst [vmem:[%s135 + $0x1a8] sm:$0xff] %v703
        %960 = vst [vmem:[%s135 + $0x1b0] sm:$0xff] %v704
        %961 = vst [vmem:[%s135 + $0x1b8] sm:$0xff] %v705
        %962 = vst [vmem:[%s135 + $0x1c0] sm:$0xff] %v706
        %963 = vst [vmem:[%s135 + $0x1c8] sm:$0xff] %v707
        %964 = vst [vmem:[%s135 + $0x1d0] sm:$0xff] %v708
        %965 = vst [vmem:[%s135 + $0x1d8] sm:$0xff] %v709
        %966 = vst [vmem:[%s135 + $0x1e0] sm:$0xff] %v710
        %967 = vst [vmem:[%s135 + $0x1e8] sm:$0xff] %v711
        %968 = vst [vmem:[%s135 + $0x1f0] sm:$0xff] %v712
        %969 = vst [vmem:[%s135 + $0x1f8] sm:$0xff] %v713
        %970 = vst [vmem:[%s135 + $0x200] sm:$0xff] %v714
        %971 = vst [vmem:[%s135 + $0x208] sm:$0xff] %v715
        %972 = vst [vmem:[%s135 + $0x210] sm:$0xff] %v716
        %973 = vst [vmem:[%s135 + $0x218] sm:$0xff] %v717
        %974 = vst [vmem:[%s135 + $0x220] sm:$0xff] %v718
        %975 = vst [vmem:[%s135 + $0x228] sm:$0xff] %v719
        %976 = vst [vmem:[%s135 + $0x230] sm:$0xff] %v720
        %977 = vst [vmem:[%s135 + $0x238] sm:$0xff] %v721
        %978 = vst [vmem:[%s135 + $0x240] sm:$0xff] %v722
        %979 = vst [vmem:[%s135 + $0x248] sm:$0xff] %v723
        %980 = vst [vmem:[%s135 + $0x250] sm:$0xff] %v724
        %981 = vst [vmem:[%s135 + $0x258] sm:$0xff] %v725
        %982 = vst [vmem:[%s135 + $0x260] sm:$0xff] %v726
        %983 = vst [vmem:[%s135 + $0x268] sm:$0xff] %v727
        %984 = vst [vmem:[%s135 + $0x270] sm:$0xff] %v728
        %985 = vst [vmem:[%s135 + $0x278] sm:$0xff] %v729
        %986 = vst [vmem:[%s135 + $0x280] sm:$0xff] %v730
        %987 = vst [vmem:[%s135 + $0x288] sm:$0xff] %v731
        %988 = vst [vmem:[%s135 + $0x290] sm:$0xff] %v732
        %989 = vst [vmem:[%s135 + $0x298] sm:$0xff] %v733
        %990 = vst [vmem:[%s135 + $0x2a0] sm:$0xff] %v734
        %991 = vst [vmem:[%s135 + $0x2a8] sm:$0xff] %v735
        %992 = vst [vmem:[%s135 + $0x2b0] sm:$0xff] %v736
        %993 = vst [vmem:[%s135 + $0x2b8] sm:$0xff] %v737
        %994 = vst [vmem:[%s135 + $0x2c0] sm:$0xff] %v738
        %995 = vst [vmem:[%s135 + $0x2c8] sm:$0xff] %v739
        %996 = vst [vmem:[%s135 + $0x2d0] sm:$0xff] %v740
        %997 = vst [vmem:[%s135 + $0x2d8] sm:$0xff] %v741
        %998 = vst [vmem:[%s135 + $0x2e0] sm:$0xff] %v742
        %999 = vst [vmem:[%s135 + $0x2e8] sm:$0xff] %v743
        %1000 = vst [vmem:[%s135 + $0x2f0] sm:$0xff] %v744
        %1001 = vst [vmem:[%s135 + $0x2f8] sm:$0xff] %v745
        %1002 = vst [vmem:[%s135 + $0x300] sm:$0xff] %v746
        %1003 = vst [vmem:[%s135 + $0x308] sm:$0xff] %v747
        %1004 = vst [vmem:[%s135 + $0x310] sm:$0xff] %v748
        %1005 = vst [vmem:[%s135 + $0x318] sm:$0xff] %v749
        %1006 = vst [vmem:[%s135 + $0x320] sm:$0xff] %v750
        %1007 = vst [vmem:[%s135 + $0x328] sm:$0xff] %v751
        %1008 = vst [vmem:[%s135 + $0x330] sm:$0xff] %v752
        %1009 = vst [vmem:[%s135 + $0x338] sm:$0xff] %v753
        %1010 = vst [vmem:[%s135 + $0x340] sm:$0xff] %v754
        %1011 = vst [vmem:[%s135 + $0x348] sm:$0xff] %v755
        %1012 = vst [vmem:[%s135 + $0x350] sm:$0xff] %v756
        %1013 = vst [vmem:[%s135 + $0x358] sm:$0xff] %v757
        %1014 = vst [vmem:[%s135 + $0x360] sm:$0xff] %v758
        %1015 = vst [vmem:[%s135 + $0x368] sm:$0xff] %v759
        %1016 = vst [vmem:[%s135 + $0x370] sm:$0xff] %v760
        %1017 = vst [vmem:[%s135 + $0x378] sm:$0xff] %v761
        %1018 = vst [vmem:[%s135 + $0x380] sm:$0xff] %v762
        %1019 = vst [vmem:[%s135 + $0x388] sm:$0xff] %v763
        %1020 = vst [vmem:[%s135 + $0x390] sm:$0xff] %v764
        %1021 = vst [vmem:[%s135 + $0x398] sm:$0xff] %v765
        %1022 = vst [vmem:[%s135 + $0x3a0] sm:$0xff] %v766
        %1023 = vst [vmem:[%s135 + $0x3a8] sm:$0xff] %v767
        %1024 = vst [vmem:[%s135 + $0x3b0] sm:$0xff] %v768
        %1025 = vst [vmem:[%s135 + $0x3b8] sm:$0xff] %v769
        %1026 = vst [vmem:[%s135 + $0x3c0] sm:$0xff] %v770
        %1027 = vst [vmem:[%s135 + $0x3c8] sm:$0xff] %v771
        %1028 = vst [vmem:[%s135 + $0x3d0] sm:$0xff] %v772
        %1029 = vst [vmem:[%s135 + $0x3d8] sm:$0xff] %v773
        %1030 = vst [vmem:[%s135 + $0x3e0] sm:$0xff] %v774
        %1031 = vst [vmem:[%s135 + $0x3e8] sm:$0xff] %v775
        %1032 = vst [vmem:[%s135 + $0x3f0] sm:$0xff] %v776
        %1033 = vst [vmem:[%s135 + $0x3f8] sm:$0xff] %v777
        %1034 = vst [vmem:[%s135 + $0x400] sm:$0xff] %v778
        %1035 = vst [vmem:[%s135 + $0x408] sm:$0xff] %v779
        %1036 = vst [vmem:[%s135 + $0x410] sm:$0xff] %v780
        %1037 = vst [vmem:[%s135 + $0x418] sm:$0xff] %v781
        %1038 = vst [vmem:[%s135 + $0x420] sm:$0xff] %v782
        %1039 = vst [vmem:[%s135 + $0x428] sm:$0xff] %v783
        %1040 = vst [vmem:[%s135 + $0x430] sm:$0xff] %v784
        %1041 = vst [vmem:[%s135 + $0x438] sm:$0xff] %v785
        %1042 = vst [vmem:[%s135 + $0x440] sm:$0xff] %v786
        %1043 = vst [vmem:[%s135 + $0x448] sm:$0xff] %v787
        %1044 = vst [vmem:[%s135 + $0x450] sm:$0xff] %v788
        %1045 = vst [vmem:[%s135 + $0x458] sm:$0xff] %v789
        %1046 = vst [vmem:[%s135 + $0x460] sm:$0xff] %v790
        %1047 = vst [vmem:[%s135 + $0x468] sm:$0xff] %v791
        %1048 = vst [vmem:[%s135 + $0x470] sm:$0xff] %v792
        %1049 = vst [vmem:[%s135 + $0x478] sm:$0xff] %v793
        %1050 = vst [vmem:[%s135 + $0x480] sm:$0xff] %v794
        %1051 = vst [vmem:[%s135 + $0x488] sm:$0xff] %v795
        %1052 = vst [vmem:[%s135 + $0x490] sm:$0xff] %v796
        %1053 = vst [vmem:[%s135 + $0x498] sm:$0xff] %v797
        %1054 = vst [vmem:[%s135 + $0x4a0] sm:$0xff] %v798
        %1055 = vst [vmem:[%s135 + $0x4a8] sm:$0xff] %v799
        %1056 = vst [vmem:[%s135 + $0x4b0] sm:$0xff] %v800
        %1057 = vst [vmem:[%s135 + $0x4b8] sm:$0xff] %v801
        %1058 = vst [vmem:[%s135 + $0x4c0] sm:$0xff] %v802
        %1059 = vst [vmem:[%s135 + $0x4c8] sm:$0xff] %v803
        %1060 = vst [vmem:[%s135 + $0x4d0] sm:$0xff] %v804
        %1061 = vst [vmem:[%s135 + $0x4d8] sm:$0xff] %v805
        %1062 = vst [vmem:[%s135 + $0x4e0] sm:$0xff] %v806
        %1063 = vst [vmem:[%s135 + $0x4e8] sm:$0xff] %v807
        %1064 = vst [vmem:[%s135 + $0x4f0] sm:$0xff] %v808
        %1065 = vst [vmem:[%s135 + $0x4f8] sm:$0xff] %v809
        %1066 = vst [vmem:[%s135 + $0x500] sm:$0xff] %v810
        %1067 = vst [vmem:[%s135 + $0x508] sm:$0xff] %v811
        %1068 = vst [vmem:[%s135 + $0x510] sm:$0xff] %v812
        %1069 = vst [vmem:[%s135 + $0x518] sm:$0xff] %v813
        %1070 = vst [vmem:[%s135 + $0x520] sm:$0xff] %v814
        %1071 = vst [vmem:[%s135 + $0x528] sm:$0xff] %v815
        %1072 = vst [vmem:[%s135 + $0x530] sm:$0xff] %v816
        %1073 = vst [vmem:[%s135 + $0x538] sm:$0xff] %v817
        %1074 = vst [vmem:[%s135 + $0x540] sm:$0xff] %v818
        %1075 = vst [vmem:[%s135 + $0x548] sm:$0xff] %v819
        %1076 = vst [vmem:[%s135 + $0x550] sm:$0xff] %v820
        %1077 = vst [vmem:[%s135 + $0x558] sm:$0xff] %v821
        %1078 = vst [vmem:[%s135 + $0x560] sm:$0xff] %v822
        %1079 = vst [vmem:[%s135 + $0x568] sm:$0xff] %v823
        %1080 = vst [vmem:[%s135 + $0x570] sm:$0xff] %v824
        %1081 = vst [vmem:[%s135 + $0x578] sm:$0xff] %v825
        %1082 = vst [vmem:[%s135 + $0x580] sm:$0xff] %v826
        %1083 = vst [vmem:[%s135 + $0x588] sm:$0xff] %v827
        %1084 = vst [vmem:[%s135 + $0x590] sm:$0xff] %v828
        %1085 = vst [vmem:[%s135 + $0x598] sm:$0xff] %v829
        %1086 = vst [vmem:[%s135 + $0x5a0] sm:$0xff] %v830
        %1087 = vst [vmem:[%s135 + $0x5a8] sm:$0xff] %v831
        %1088 = vst [vmem:[%s135 + $0x5b0] sm:$0xff] %v832
        %1089 = vst [vmem:[%s135 + $0x5b8] sm:$0xff] %v833
        %1090 = vst [vmem:[%s135 + $0x5c0] sm:$0xff] %v834
        %1091 = vst [vmem:[%s135 + $0x5c8] sm:$0xff] %v835
        %1092 = vst [vmem:[%s135 + $0x5d0] sm:$0xff] %v836
        %1093 = vst [vmem:[%s135 + $0x5d8] sm:$0xff] %v837
        %1094 = vst [vmem:[%s135 + $0x5e0] sm:$0xff] %v838
        %1095 = vst [vmem:[%s135 + $0x5e8] sm:$0xff] %v839
        %1096 = vst [vmem:[%s135 + $0x5f0] sm:$0xff] %v840
        %1097 = vst [vmem:[%s135 + $0x5f8] sm:$0xff] %v841
        %1098 = vst [vmem:[%s135 + $0x600] sm:$0xff] %v842
        %1099 = vst [vmem:[%s135 + $0x608] sm:$0xff] %v843
        %1100 = vst [vmem:[%s135 + $0x610] sm:$0xff] %v844
        %1101 = vst [vmem:[%s135 + $0x618] sm:$0xff] %v845
        %1102 = vst [vmem:[%s135 + $0x620] sm:$0xff] %v846
        %1103 = vst [vmem:[%s135 + $0x628] sm:$0xff] %v847
        %1104 = vst [vmem:[%s135 + $0x630] sm:$0xff] %v848
        %1105 = vst [vmem:[%s135 + $0x638] sm:$0xff] %v849
        %1106 = vst [vmem:[%s135 + $0x640] sm:$0xff] %v850
        %1107 = vst [vmem:[%s135 + $0x648] sm:$0xff] %v851
        %1108 = vst [vmem:[%s135 + $0x650] sm:$0xff] %v852
        %1109 = vst [vmem:[%s135 + $0x658] sm:$0xff] %v853
        %1110 = vst [vmem:[%s135 + $0x660] sm:$0xff] %v854
        %1111 = vst [vmem:[%s135 + $0x668] sm:$0xff] %v855
        %1112 = vst [vmem:[%s135 + $0x670] sm:$0xff] %v856
        %1113 = vst [vmem:[%s135 + $0x678] sm:$0xff] %v857
        %1114 = vst [vmem:[%s135 + $0x680] sm:$0xff] %v858
        %1115 = vst [vmem:[%s135 + $0x688] sm:$0xff] %v859
        %1116 = vst [vmem:[%s135 + $0x690] sm:$0xff] %v860
        %1117 = vst [vmem:[%s135 + $0x698] sm:$0xff] %v861
        %1118 = vst [vmem:[%s135 + $0x6a0] sm:$0xff] %v862
        %1119 = vst [vmem:[%s135 + $0x6a8] sm:$0xff] %v863
        %1120 = vst [vmem:[%s135 + $0x6b0] sm:$0xff] %v864
        %1121 = vst [vmem:[%s135 + $0x6b8] sm:$0xff] %v865
        %1122 = vst [vmem:[%s135 + $0x6c0] sm:$0xff] %v866
        %1123 = vst [vmem:[%s135 + $0x6c8] sm:$0xff] %v867
        %1124 = vst [vmem:[%s135 + $0x6d0] sm:$0xff] %v868
        %1125 = vst [vmem:[%s135 + $0x6d8] sm:$0xff] %v869
        %1126 = vst [vmem:[%s135 + $0x6e0] sm:$0xff] %v870
        %1127 = vst [vmem:[%s135 + $0x6e8] sm:$0xff] %v871
        %1128 = vst [vmem:[%s135 + $0x6f0] sm:$0xff] %v872
        %1129 = vst [vmem:[%s135 + $0x6f8] sm:$0xff] %v873
        %1130 = vst [vmem:[%s135 + $0x700] sm:$0xff] %v874
        %1131 = vst [vmem:[%s135 + $0x708] sm:$0xff] %v875
        %1132 = vst [vmem:[%s135 + $0x710] sm:$0xff] %v876
        %1133 = vst [vmem:[%s135 + $0x718] sm:$0xff] %v877
        %1134 = vst [vmem:[%s135 + $0x720] sm:$0xff] %v878
        %1135 = vst [vmem:[%s135 + $0x728] sm:$0xff] %v879
        %1136 = vst [vmem:[%s135 + $0x730] sm:$0xff] %v880
        %1137 = vst [vmem:[%s135 + $0x738] sm:$0xff] %v881
        %1138 = vst [vmem:[%s135 + $0x740] sm:$0xff] %v882
        %1139 = vst [vmem:[%s135 + $0x748] sm:$0xff] %v883
        %1140 = vst [vmem:[%s135 + $0x750] sm:$0xff] %v884
        %1141 = vst [vmem:[%s135 + $0x758] sm:$0xff] %v885
        %1142 = vst [vmem:[%s135 + $0x760] sm:$0xff] %v886
        %1143 = vst [vmem:[%s135 + $0x768] sm:$0xff] %v887
        %1144 = vst [vmem:[%s135 + $0x770] sm:$0xff] %v888
        %1145 = vst [vmem:[%s135 + $0x778] sm:$0xff] %v889
        %1146 = vst [vmem:[%s135 + $0x780] sm:$0xff] %v890
        %1147 = vst [vmem:[%s135 + $0x788] sm:$0xff] %v891
        %1148 = vst [vmem:[%s135 + $0x790] sm:$0xff] %v892
        %1149 = vst [vmem:[%s135 + $0x798] sm:$0xff] %v893
        %1150 = vst [vmem:[%s135 + $0x7a0] sm:$0xff] %v894
        %1151 = vst [vmem:[%s135 + $0x7a8] sm:$0xff] %v895
        %1152 = vst [vmem:[%s135 + $0x7b0] sm:$0xff] %v896
        %1153 = vst [vmem:[%s135 + $0x7b8] sm:$0xff] %v897
        %1154 = vst [vmem:[%s135 + $0x7c0] sm:$0xff] %v898
        %1155 = vst [vmem:[%s135 + $0x7c8] sm:$0xff] %v899
        %1156 = vst [vmem:[%s135 + $0x7d0] sm:$0xff] %v900
        %1157 = vst [vmem:[%s135 + $0x7d8] sm:$0xff] %v901
        %1158 = vst [vmem:[%s135 + $0x7e0] sm:$0xff] %v902
        %1159 = vst [vmem:[%s135 + $0x7e8] sm:$0xff] %v903
        %1160 = vst [vmem:[%s135 + $0x7f0] sm:$0xff] %v904
        %1161 = vst [vmem:[%s135 + $0x7f8] sm:$0xff] %v905
        %s1162 = sand.u32 %s52, 1
        %s1163 = scalar_lea.sflag [#allocation4], %s1162
        %s1164 = sand.u32 %s52, 1
        %s1165 = smul.addr %s1164, 2048
        %s1166 = scalar_lea.vmem [#allocation5], %s1165
        // Predicated region
        $region29: #{tpu_custom_call.1} parent=23 // pred_check
          %p1167 = pneg %p62
        $region30: #{tpu_custom_call.1} parent=23 // pred_check_branch
          %1169 = sbr.rel (%p1167) target = $region32
        $region31: #{tpu_custom_call.1} parent=23 // pred_region
          %s1170 = smul.u32 8, %s18
          %s1172 = ssub.s32 32768, 32768
          %1173 = vsyncadd %s1163, %s1172
          %s1174 = smul.addr %s1170, 32
          %s1175 = smul.addr %s1174, 128
          %s1176 = scalar_lea.hbm %s1, %s1175
          %s1177 = sshll.u32 %s1166, 4
          %s1178 = int_to_ptr.vmem [resolvable:$true] %s1177
          %1183 = dma.vmem_to_hbm [thread:$0]  %s1178, 32768, %s1176, %s1163, 4096, 4096, 256
        $region32: #{tpu_custom_call.1} parent=23 // pred_fallthru
          _
      $region24: #{tpu_custom_call.1} parent=5 // pred_fallthru
        _
      %p1184 = scmp.le.s32.totalorder 2, %s13
      // Predicated region
      $region33: #{tpu_custom_call.1} parent=5 // pred_check
        %p1185 = pneg %p1184
      $region34: #{tpu_custom_call.1} parent=5 // pred_check_branch
        %1187 = sbr.rel (%p1185) target = $region36
      $region35: #{tpu_custom_call.1} parent=5 // pred_region
        %s1188 = ssub.s32 %s13, 2
        // Predicated region
        $region37: #{tpu_custom_call.1} parent=35 // pred_check
          %p1189 = pneg %p68
        $region38: #{tpu_custom_call.1} parent=35 // pred_check_branch
          %1191 = sbr.rel (%p1189) target = $region40
        $region39: #{tpu_custom_call.1} parent=35 // pred_region
          %s1192 = sand.u32 %s53, 1
          %s1193 = scalar_lea.sflag [#allocation4], %s1192
          %s1194 = sand.u32 %s53, 1
          %s1195 = smul.addr %s1194, 2048
          %s1196 = scalar_lea.vmem [#allocation5], %s1195
          %1197 = dma.done %s1193, 32768
        $region40: #{tpu_custom_call.1} parent=35 // pred_fallthru
          _
      $region36: #{tpu_custom_call.1} parent=5 // pred_fallthru
        _
    $region6: #{tpu_custom_call.1} parent=1 // loop_footer
      %s17 = sadd.s32 1, %s13
    $region7: #{tpu_custom_call.1} parent=1 // loop_footer_branch
      %12 = sbr.rel target = $region3
    $region8: #{tpu_custom_call.1} parent=1 // loop_exit
      _
    %1198 = vsyncpa [#allocation3], 1
    %s1199 = scalar_lea.sflag [#allocation3], 1
    %1200 = vsyncpa %s1199, 1
    %1201 = vsyncpa [#allocation4], 1
    %s1202 = scalar_lea.sflag [#allocation4], 1
    %1203 = vsyncpa %s1202, 1

</llo_original>
